<compile_context>
chip_gen: v7x
topology: tpu7x:2x2x1
jax: 0.10.0
libtpu: 0.0.40
codegen_flags: <defaults>
</compile_context>

<pallas_src>
import jax
import jax.numpy as jnp
from jax.experimental import pallas as pl
from jax.experimental.pallas import tpu as pltpu


# ----------------------------- Pallas kernel --------------------------------
def _make_gcn_kernel(tk):
    """Grid = (row_tiles, k_tiles).
    Computes Y[i] = d_row[i] * sum_k (A_cnt[i,k] @ XW[k]) + b, with
    XW already scaled by d^{-1/2} on the contraction side in the wrapper.

    a_ref   : (TM, TK)        int8 edge counts (A + I), un-normalized
    xw_ref  : (N_pad, Cpad)   D^{-1/2} @ (X @ [W_mu|W_ls])  (resident, bf16/f32)
    drow_ref: (TM, 1)         d^{-1/2} for this row tile    (f32)
    b_ref   : (1, Cpad)       fused bias                    (f32)
    y_ref   : (TM, Cpad)      fused output tile             (f32)
    acc_ref : VMEM (TM, Cpad) f32 accumulator
    """

    def kernel(a_ref, xw_ref, drow_ref, b_ref, y_ref, acc_ref):
        k = pl.program_id(1)

        # int8 counts -> compute dtype (VPU work, hidden under the A-tile DMA).
        a = a_ref[...].astype(jnp.float32).astype(xw_ref.dtype)
        start = pl.multiple_of(k * tk, tk)
        prod = jnp.dot(a, xw_ref[pl.ds(start, tk), :],
                       preferred_element_type=jnp.float32)

        @pl.when(k == 0)
        def _first():
            acc_ref[...] = prod          # write-through: no zero-fill pass

        @pl.when(k != 0)
        def _rest():
            acc_ref[...] += prod

        @pl.when(k == pl.num_programs(1) - 1)
        def _finalize():
            y_ref[...] = drow_ref[...] * acc_ref[...] + b_ref[...]

    return kernel


def _round_up(v, m):
    return -(-v // m) * m


# ------------------------------- wrapper -------------------------------------
def variational_linear_encoder(x, edge_index, w_mu, b_mu, w_ls, b_ls,
                               *, compute_dtype=jnp.bfloat16):
    """x: [N, Fin] f32, edge_index: [2, E] int32 (row 0 = source, row 1 = target)."""
    n, f_in = x.shape
    f_out = w_mu.shape[1]
    c = 2 * f_out
    c_pad = max(128, _round_up(c, 128))           # lane-dense fused channel dim

    n_pad = _round_up(n, 256)
    # >= 2 row tiles so v7x's two TensorCores both get work on the "parallel" axis.
    tm = 128 if n_pad <= 1024 else 256
    # Large contraction tile: longer contiguous A DMAs, fewer grid steps.
    tk = max(cand for cand in (1024, 512, 256) if n_pad % cand == 0)

    src = edge_index[0]
    tgt = edge_index[1]

    # ---- A as int8 edge counts (single scatter into the padded buffer) ----
    # NOTE: duplicate-edge multiplicity must stay <= 126 (int8); always true for kNN.
    diag = jnp.arange(n)
    a_cnt = (jnp.zeros((n_pad, n_pad), jnp.int8)
             .at[tgt, src].add(1)                  # count duplicate edges like PyG
             .at[diag, diag].add(1))               # self-loops
    # Degrees via O(E) segment-sum (no extra N^2 pass); deg >= 1 thanks to self-loop.
    deg = jnp.zeros((n,), jnp.float32).at[tgt].add(1.0) + 1.0
    d_inv_sqrt = jnp.pad(jax.lax.rsqrt(deg), (0, n_pad - n))      # [n_pad]
    d_row = d_inv_sqrt.reshape(n_pad, 1)                           # row-side scale

    # ---- fuse the two heads, precompute XW (hoisted out of the kernel) ----
    w = jnp.concatenate([w_mu, w_ls], axis=1)                      # [Fin, 2*Fout]
    b = jnp.concatenate([b_mu.reshape(1, -1), b_ls.reshape(1, -1)], axis=1)
    w = jnp.pad(w, ((0, 0), (0, c_pad - c))).astype(compute_dtype)
    b = jnp.pad(b, ((0, 0), (0, c_pad - c))).astype(jnp.float32)

    x_p = jnp.pad(x, ((0, n_pad - n), (0, 0))).astype(compute_dtype)
    xw = jnp.dot(x_p, w, preferred_element_type=jnp.float32)       # [n_pad, c_pad]
    xw = (xw * d_inv_sqrt[:, None]).astype(compute_dtype)          # fold col-side norm

    grid = (n_pad // tm, n_pad // tk)             # (row tiles, contraction tiles)

    # VMEM footprint (A double-buffered + resident XW + small tiles), with headroom.
    itemsize = jnp.dtype(compute_dtype).itemsize
    vmem_est = (2 * tm * tk * 1                    # int8 A tiles
                + 2 * n_pad * c_pad * itemsize     # resident XW (worst case 2 bufs)
                + 2 * tm * 4 + 2 * c_pad * 4       # d_row + bias
                + 2 * tm * c_pad * 4               # output tiles
                + tm * c_pad * 4)                  # accumulator
    vmem_limit = int(min(48 << 20, max(8 << 20, 2 * vmem_est)))

    out = pl.pallas_call(
        _make_gcn_kernel(tk),
        out_shape=jax.ShapeDtypeStruct((n_pad, c_pad), jnp.float32),
        grid_spec=pltpu.PrefetchScalarGridSpec(
            num_scalar_prefetch=0,
            grid=grid,
            in_specs=[
                pl.BlockSpec((tm, tk), lambda i, k: (i, k)),        # A counts (int8)
                pl.BlockSpec((n_pad, c_pad), lambda i, k: (0, 0)),  # XW (resident)
                pl.BlockSpec((tm, 1), lambda i, k: (i, 0)),         # d^{-1/2} rows
                pl.BlockSpec((1, c_pad), lambda i, k: (0, 0)),      # fused bias
            ],
            out_specs=pl.BlockSpec((tm, c_pad), lambda i, k: (i, 0)),
            scratch_shapes=[pltpu.VMEM((tm, c_pad), jnp.float32)],
        ),
        compiler_params=pltpu.CompilerParams(
            dimension_semantics=("parallel", "arbitrary"),
            vmem_limit_bytes=vmem_limit,
        ),
    )(a_cnt, xw, d_row, b)

    y = out[:n, :c]
    return y[:, :f_out], y[:, f_out:]


# ------------------------------- glue / demo --------------------------------
def knn_edge_index(pos, k=2):
    """Deterministic knn_graph(k, loop=False, flow='source_to_target') equivalent."""
    n = pos.shape[0]
    d2 = jnp.sum((pos[:, None, :] - pos[None, :, :]) ** 2, axis=-1)
    d2 = d2 + jnp.eye(n) * 1e30                       # exclude self
    nbrs = jnp.argsort(d2, axis=1)[:, :k]             # [N, k] nearest neighbors
    tgt = jnp.repeat(jnp.arange(n), k)                # center node = target
    src = nbrs.reshape(-1)                            # neighbor    = source
    return jnp.stack([src, tgt]).astype(jnp.int32)    # [2, N*k]


if __name__ == "__main__":
    N, F_IN, F_OUT = 16, 32, 8

    key = jax.random.PRNGKey(0)
    kx, kwm, kwl = jax.random.split(key, 3)

    # node features (pos == x in the reference script)
    x = jax.random.normal(kx, (N, F_IN), dtype=jnp.float32)
    edge_index = knn_edge_index(x, k=2)

    # deterministic parameter init (GCNConv: weight [Fin, Fout] glorot-ish, bias zeros)
    scale = (6.0 / (F_IN + F_OUT)) ** 0.5
    w_mu = jax.random.uniform(kwm, (F_IN, F_OUT), jnp.float32, -scale, scale)
    w_ls = jax.random.uniform(kwl, (F_IN, F_OUT), jnp.float32, -scale, scale)
    b_mu = jnp.zeros((1, F_OUT), jnp.float32)
    b_ls = jnp.zeros((1, F_OUT), jnp.float32)

    # fast path (bf16 XW, int8 A stream, f32 accumulation)
    mu, logstd = variational_linear_encoder(x, edge_index, w_mu, b_mu, w_ls, b_ls)
    # exact path (f32 end-to-end except the int8 counts, which are exact) for checking
    mu32, ls32 = variational_linear_encoder(x, edge_index, w_mu, b_mu, w_ls, b_ls,
                                            compute_dtype=jnp.float32)
    jax.block_until_ready((mu, logstd, mu32, ls32))

    # reference in plain JAX
    src, tgt = edge_index[0], edge_index[1]
    a = jnp.zeros((N, N)).at[tgt, src].add(1.0) + jnp.eye(N)
    deg = a.sum(1)
    dis = jnp.where(deg > 0, 1.0 / jnp.sqrt(deg), 0.0)
    a_hat = dis[:, None] * a * dis[None, :]
    mu_ref = a_hat @ (x @ w_mu) + b_mu
    ls_ref = a_hat @ (x @ w_ls) + b_ls

    assert jnp.allclose(mu32, mu_ref, atol=1e-4), "mu (f32) mismatch"
    assert jnp.allclose(ls32, ls_ref, atol=1e-4), "logstd (f32) mismatch"
    assert jnp.allclose(mu, mu_ref, atol=5e-2, rtol=5e-2), "mu (bf16) mismatch"
    assert jnp.allclose(logstd, ls_ref, atol=5e-2, rtol=5e-2), "logstd (bf16) mismatch"

    print("KERNEL_OK")
</pallas_src>

<mosaic_0001>
module attributes {stable_mosaic.version = 11 : i64} {
  func.func @kernel(%arg0: i32, %arg1: i32, %arg2: memref<128x256xi8, #tpu.memory_space<vmem>>, %arg3: memref<256x128xbf16, #tpu.memory_space<vmem>>, %arg4: memref<128x1xf32, #tpu.memory_space<vmem>>, %arg5: memref<1x128xf32, #tpu.memory_space<vmem>>, %arg6: memref<128x128xf32, #tpu.memory_space<vmem>>, %arg7: memref<128x128xf32, #tpu.memory_space<vmem>>) attributes {dimension_semantics = [#tpu.dimension_semantics<parallel>, #tpu.dimension_semantics<arbitrary>], iteration_bounds = array<i64: 2, 1>, scalar_prefetch = 0 : i64, scratch_operands = 1 : i64, tpu.core_type = #tpu.core_type<tc>, window_params = [{transform_indices = @transform_0, window_bounds = array<i64: 128, 256>}, {pipeline_mode = #tpu.pipeline_mode<synchronous>, transform_indices = @transform_1, window_bounds = array<i64: 256, 128>}, {transform_indices = @transform_2, window_bounds = array<i64: 128, 1>}, {pipeline_mode = #tpu.pipeline_mode<synchronous>, transform_indices = @transform_3, window_bounds = array<i64: 1, 128>}, {transform_indices = @transform_4, window_bounds = array<i64: 128, 128>}]} {
    %c0 = arith.constant 0 : index
    %c0_0 = arith.constant 0 : index
    %0 = vector.load %arg2[%c0, %c0_0] : memref<128x256xi8, #tpu.memory_space<vmem>>, vector<128x256xi8>
    %1 = arith.sitofp %0 : vector<128x256xi8> to vector<128x256xf32>
    %2 = arith.truncf %1 : vector<128x256xf32> to vector<128x256xbf16>
    %c256_i32 = arith.constant 256 : i32
    %3 = arith.muli %arg1, %c256_i32 : i32
    %4 = tpu.assume_multiple %3, 256 : i32
    %5 = arith.index_cast %4 : i32 to index
    %c0_1 = arith.constant 0 : index
    %6 = vector.load %arg3[%5, %c0_1] : memref<256x128xbf16, #tpu.memory_space<vmem>>, vector<256x128xbf16>
    %cst = arith.constant dense<0.000000e+00> : vector<128x128xf32>
    %7 = tpu.matmul %2, %6, %cst {dimension_numbers = #tpu.dot_dimension_numbers<[1], [0], [0], [1], [0, 0, 1, 1], [], []>} : vector<128x256xbf16>, vector<256x128xbf16>, vector<128x128xf32> -> vector<128x128xf32>
    %c0_i32 = arith.constant 0 : i32
    %8 = arith.cmpi eq, %arg1, %c0_i32 : i32
    %9 = arith.extui %8 : i1 to i32
    %c0_i32_2 = arith.constant 0 : i32
    %10 = arith.cmpi ne, %9, %c0_i32_2 : i32
    scf.if %10 {
      %c0_7 = arith.constant 0 : index
      %c0_8 = arith.constant 0 : index
      %17 = vector.load %arg7[%c0_7, %c0_8] : memref<128x128xf32, #tpu.memory_space<vmem>>, vector<128x128xf32>
      tpu.vector_store %arg7[%c0_7, %c0_8], %7 {strides = array<i32>} : memref<128x128xf32, #tpu.memory_space<vmem>>, vector<128x128xf32>,
    } else {
    }
    %c0_i32_3 = arith.constant 0 : i32
    %11 = arith.cmpi ne, %arg1, %c0_i32_3 : i32
    %12 = arith.extui %11 : i1 to i32
    %c0_i32_4 = arith.constant 0 : i32
    %13 = arith.cmpi ne, %12, %c0_i32_4 : i32
    scf.if %13 {
      %c0_7 = arith.constant 0 : index
      %c0_8 = arith.constant 0 : index
      %17 = vector.load %arg7[%c0_7, %c0_8] : memref<128x128xf32, #tpu.memory_space<vmem>>, vector<128x128xf32>
      %18 = arith.addf %17, %7 : vector<128x128xf32>
      %c0_9 = arith.constant 0 : index
      %c0_10 = arith.constant 0 : index
      %19 = vector.load %arg7[%c0_9, %c0_10] : memref<128x128xf32, #tpu.memory_space<vmem>>, vector<128x128xf32>
      tpu.vector_store %arg7[%c0_9, %c0_10], %18 {strides = array<i32>} : memref<128x128xf32, #tpu.memory_space<vmem>>, vector<128x128xf32>,
    } else {
    }
    %c0_i32_5 = arith.constant 0 : i32
    %14 = arith.cmpi eq, %arg1, %c0_i32_5 : i32
    %15 = arith.extui %14 : i1 to i32
    %c0_i32_6 = arith.constant 0 : i32
    %16 = arith.cmpi ne, %15, %c0_i32_6 : i32
    scf.if %16 {
      %c0_7 = arith.constant 0 : index
      %c0_8 = arith.constant 0 : index
      %17 = vector.load %arg4[%c0_7, %c0_8] : memref<128x1xf32, #tpu.memory_space<vmem>>, vector<128x1xf32>
      %c0_9 = arith.constant 0 : index
      %c0_10 = arith.constant 0 : index
      %18 = vector.load %arg7[%c0_9, %c0_10] : memref<128x128xf32, #tpu.memory_space<vmem>>, vector<128x128xf32>
      %19 = vector.broadcast %17 : vector<128x1xf32> to vector<128x128xf32>
      %20 = arith.mulf %19, %18 : vector<128x128xf32>
      %c0_11 = arith.constant 0 : index
      %c0_12 = arith.constant 0 : index
      %21 = vector.load %arg5[%c0_11, %c0_12] : memref<1x128xf32, #tpu.memory_space<vmem>>, vector<1x128xf32>
      %22 = vector.broadcast %21 : vector<1x128xf32> to vector<128x128xf32>
      %23 = arith.addf %20, %22 : vector<128x128xf32>
      %c0_13 = arith.constant 0 : index
      %c0_14 = arith.constant 0 : index
      %24 = vector.load %arg6[%c0_13, %c0_14] : memref<128x128xf32, #tpu.memory_space<vmem>>, vector<128x128xf32>
      tpu.vector_store %arg6[%c0_13, %c0_14], %23 {strides = array<i32>} : memref<128x128xf32, #tpu.memory_space<vmem>>, vector<128x128xf32>,
    } else {
    }
    return
  }
  func.func @transform_0(%arg0: i32, %arg1: i32) -> (i32, i32) {
    %c0_i32 = arith.constant 0 : i32
    return %arg0, %arg1 : i32, i32
  }
  func.func @transform_1(%arg0: i32, %arg1: i32) -> (i32, i32) {
    %c0_i32 = arith.constant 0 : i32
    %c0_i32_0 = arith.constant 0 : i32
    %c0_i32_1 = arith.constant 0 : i32
    return %c0_i32, %c0_i32_0 : i32, i32
  }
  func.func @transform_2(%arg0: i32, %arg1: i32) -> (i32, i32) {
    %c0_i32 = arith.constant 0 : i32
    %c0_i32_0 = arith.constant 0 : i32
    return %arg0, %c0_i32 : i32, i32
  }
  func.func @transform_3(%arg0: i32, %arg1: i32) -> (i32, i32) {
    %c0_i32 = arith.constant 0 : i32
    %c0_i32_0 = arith.constant 0 : i32
    %c0_i32_1 = arith.constant 0 : i32
    return %c0_i32, %c0_i32_0 : i32, i32
  }
  func.func @transform_4(%arg0: i32, %arg1: i32) -> (i32, i32) {
    %c0_i32 = arith.constant 0 : i32
    %c0_i32_0 = arith.constant 0 : i32
    return %arg0, %c0_i32 : i32, i32
  }
}

</mosaic_0001>

<llo_original>
// kernel: tpu_custom_call.1
$region0: #{tpu_custom_call.1}
  #allocation0 [shape = 'u32[]', space=smem, size = 0x4, offset = 0x4, fixed_abs, tag = 'smem constant byte address 0x4 - core index']
  #allocation1 [shape = 'u32[144,128]{1,0:T(1,128)}', space=vmem, size = 0x12000, scoped, tag = 'internal scratch']
  #allocation2 [shape = 'f32[128,128]{1,0:T(8,128)}', space=vmem, size = 0x10000, scoped, tag = 'scratch operand']
  %s0 = inlined_call_operand.vmem [shape: s8[256,256], index: 0, kind: input, shape index: {}]
  %s1 = inlined_call_operand.vmem [shape: bf16[256,128], index: 1, kind: input, shape index: {}]
  %s2 = inlined_call_operand.vmem [shape: f32[256,1], index: 2, kind: input, shape index: {}]
  %s3 = inlined_call_operand.vmem [shape: f32[1,128], index: 3, kind: input, shape index: {}]
  %s4 = inlined_call_operand.hbm [shape: f32[256,128], index: 4, kind: output, shape index: {}]
  %s5 = sld [smem:[#allocation0]]
  $region61: #{tpu_custom_call.1} parent=0
    _
  %s7 = ssub.s32 1, %s5
  %s8 = scalar_select 0, %s7, %s5
  $region1: #{tpu_custom_call.1} parent=0
    #allocation3 [shape = 'u8[131072]{0}', space=vmem, size = 0x20000, scoped, tag = 'output window, operand 0']
    #allocation4 [shape = 's32[2]{0}', space=sflag, size = 0x8, scoped, tag = 'scoped memory for tpu_custom_call.1']
    %9 = vsyncpa [#allocation4], 0
    %s10 = scalar_lea.sflag [#allocation4], 1
    %11 = vsyncpa %s10, 0
    loop: start=0, step=1, limit=4
    $region2: #{tpu_custom_call.1} parent=1 // loop_pre_header
      _
    $region3: #{tpu_custom_call.1} parent=1 // loop_header
      %s13 = sphi 0, %s17
      %p14 = scmp.ge.s32.totalorder %s13, 4
      %s20 = sphi 0, %s32
      %s21 = sphi 0, %s28
      %s22 = sphi 0, %s20
      %s23 = sphi 0, %s21
      %s24 = sphi 0, %s22
      %s25 = sphi 0, %s23
      %s37 = sphi 0, %s39
      %s40 = sphi 0, %s37
      %s41 = sphi 0, %s40
      %s57 = sphi 0, %s41
      %s61 = sphi 0, %s61
      %s63 = sphi 0, %s61
      %s64 = sphi 0, %s63
      %s78 = sphi 0, %s64
      %s84 = sphi 0, %s86
      %s87 = sphi 0, %s84
      %s88 = sphi 0, %s87
      %s104 = sphi 0, %s88
      %s108 = sphi 0, %s108
      %s110 = sphi 0, %s108
      %s111 = sphi 0, %s110
      %s125 = sphi 0, %s111
      %s131 = sphi 0, %s133
      %s134 = sphi 0, %s131
      %s135 = sphi 0, %s134
      %s151 = sphi 0, %s135
    $region4: #{tpu_custom_call.1} parent=1 // loop_header_branch
      %16 = sbr.rel (%p14) target = $region8
    $region5: #{tpu_custom_call.1} parent=1 // loop_body
      %s18 = ssub.s32 %s13, 1
      %s19 = ssub.s32 %s13, 2
      %s26 = sadd.s32 1, %s21
      %p27 = scmp.ge.s32.totalorder %s26, 1
      %s28 = scalar_select %p27, 0, %s26
      %s29 = sadd.s32 1, %s20
      %s30 = scalar_select %p27, %s29, %s20
      %p31 = scmp.ge.s32.totalorder %s30, 2
      %s32 = scalar_select %p31, 0, %s30
      %s33 = ssub.s32 %s20, %s32
      %s34 = ssub.s32 %s21, %s28
      %s35 = sor.u32 %s33, %s34
      %p36 = scmp.eq.s32.totalorder %s35, 0
      %s38 = sadd.s32 %s37, 1
      %s39 = scalar_select %p36, %s37, %s38
      %p42 = pneg %p36
      %p43 = scmp.eq.s32.totalorder %s13, 1
      %p44 = por %p42, %p43
      %p45 = scmp.ne.s32.totalorder %s37, %s40
      %p46 = scmp.eq.s32.totalorder %s13, 0
      %p47 = por %p45, %p46
      %p48 = scmp.ne.s32.totalorder %s37, %s40
      %p49 = scmp.eq.s32.totalorder %s18, 1
      %p50 = por %p48, %p49
      %p51 = scmp.ne.s32.totalorder %s40, %s41
      %p52 = scmp.eq.s32.totalorder %s18, 0
      %p53 = por %p51, %p52
      %p54 = scmp.ne.s32.totalorder %s40, %s41
      %p55 = scmp.eq.s32.totalorder %s19, 1
      %p56 = por %p54, %p55
      %p58 = scmp.ne.s32.totalorder %s41, %s57
      %p59 = scmp.eq.s32.totalorder %s19, 0
      %p60 = por %p58, %p59
      %s62 = sadd.s32 %s61, 1
      %p65 = scmp.eq.s32.totalorder %s13, 1
      %p66 = scmp.ne.s32.totalorder %s61, %s63
      %p67 = scmp.eq.s32.totalorder %s13, 0
      %p68 = por %p66, %p67
      %p69 = scmp.ne.s32.totalorder %s61, %s63
      %p70 = scmp.eq.s32.totalorder %s18, 1
      %p71 = por %p69, %p70
      %p72 = scmp.ne.s32.totalorder %s63, %s64
      %p73 = scmp.eq.s32.totalorder %s18, 0
      %p74 = por %p72, %p73
      %p75 = scmp.ne.s32.totalorder %s63, %s64
      %p76 = scmp.eq.s32.totalorder %s19, 1
      %p77 = por %p75, %p76
      %p79 = scmp.ne.s32.totalorder %s64, %s78
      %p80 = scmp.eq.s32.totalorder %s19, 0
      %p81 = por %p79, %p80
      %s82 = ssub.s32 %s20, %s32
      %p83 = scmp.eq.s32.totalorder %s82, 0
      %s85 = sadd.s32 %s84, 1
      %s86 = scalar_select %p83, %s84, %s85
      %p89 = pneg %p83
      %p90 = scmp.eq.s32.totalorder %s13, 1
      %p91 = por %p89, %p90
      %p92 = scmp.ne.s32.totalorder %s84, %s87
      %p93 = scmp.eq.s32.totalorder %s13, 0
      %p94 = por %p92, %p93
      %p95 = scmp.ne.s32.totalorder %s84, %s87
      %p96 = scmp.eq.s32.totalorder %s18, 1
      %p97 = por %p95, %p96
      %p98 = scmp.ne.s32.totalorder %s87, %s88
      %p99 = scmp.eq.s32.totalorder %s18, 0
      %p100 = por %p98, %p99
      %p101 = scmp.ne.s32.totalorder %s87, %s88
      %p102 = scmp.eq.s32.totalorder %s19, 1
      %p103 = por %p101, %p102
      %p105 = scmp.ne.s32.totalorder %s88, %s104
      %p106 = scmp.eq.s32.totalorder %s19, 0
      %p107 = por %p105, %p106
      %s109 = sadd.s32 %s108, 1
      %p112 = scmp.eq.s32.totalorder %s13, 1
      %p113 = scmp.ne.s32.totalorder %s108, %s110
      %p114 = scmp.eq.s32.totalorder %s13, 0
      %p115 = por %p113, %p114
      %p116 = scmp.ne.s32.totalorder %s108, %s110
      %p117 = scmp.eq.s32.totalorder %s18, 1
      %p118 = por %p116, %p117
      %p119 = scmp.ne.s32.totalorder %s110, %s111
      %p120 = scmp.eq.s32.totalorder %s18, 0
      %p121 = por %p119, %p120
      %p122 = scmp.ne.s32.totalorder %s110, %s111
      %p123 = scmp.eq.s32.totalorder %s19, 1
      %p124 = por %p122, %p123
      %p126 = scmp.ne.s32.totalorder %s111, %s125
      %p127 = scmp.eq.s32.totalorder %s19, 0
      %p128 = por %p126, %p127
      %s129 = ssub.s32 %s20, %s32
      %p130 = scmp.eq.s32.totalorder %s129, 0
      %s132 = sadd.s32 %s131, 1
      %s133 = scalar_select %p130, %s131, %s132
      %p136 = pneg %p130
      %p137 = scmp.eq.s32.totalorder %s13, 1
      %p138 = por %p136, %p137
      %p139 = scmp.ne.s32.totalorder %s131, %s134
      %p140 = scmp.eq.s32.totalorder %s13, 0
      %p141 = por %p139, %p140
      %p142 = scmp.ne.s32.totalorder %s131, %s134
      %p143 = scmp.eq.s32.totalorder %s18, 1
      %p144 = por %p142, %p143
      %p145 = scmp.ne.s32.totalorder %s134, %s135
      %p146 = scmp.eq.s32.totalorder %s18, 0
      %p147 = por %p145, %p146
      %p148 = scmp.ne.s32.totalorder %s134, %s135
      %p149 = scmp.eq.s32.totalorder %s19, 1
      %p150 = por %p148, %p149
      %p152 = scmp.ne.s32.totalorder %s135, %s151
      %p153 = scmp.eq.s32.totalorder %s19, 0
      %p154 = por %p152, %p153
      %p155 = scmp.le.s32.totalorder 1, %s13
      %p156 = scmp.lt.s32.totalorder %s13, 3
      %p157 = pnand %p155, %p156
      %p158 = pneg %p157
      // Predicated region
      $region9: #{tpu_custom_call.1} parent=5 // pred_check
        _
      $region10: #{tpu_custom_call.1} parent=5 // pred_check_branch
        %160 = sbr.rel (%p157) target = $region12
      $region11: #{tpu_custom_call.1} parent=5 // pred_region
        %s161 = ssub.s32 %s13, 1
        // Predicated region
        $region13: #{tpu_custom_call.1} parent=11 // pred_check
          %p162 = pneg %p74
        $region14: #{tpu_custom_call.1} parent=11 // pred_check_branch
          %164 = sbr.rel (%p162) target = $region16
        $region15: #{tpu_custom_call.1} parent=11 // pred_region
          _
        $region16: #{tpu_custom_call.1} parent=11 // pred_fallthru
          _
        // Predicated region
        $region17: #{tpu_custom_call.1} parent=11 // pred_check
          %p165 = pneg %p121
        $region18: #{tpu_custom_call.1} parent=11 // pred_check_branch
          %167 = sbr.rel (%p165) target = $region20
        $region19: #{tpu_custom_call.1} parent=11 // pred_region
          _
        $region20: #{tpu_custom_call.1} parent=11 // pred_fallthru
          _
      $region12: #{tpu_custom_call.1} parent=5 // pred_fallthru
        _
      %p168 = scmp.lt.s32.totalorder %s13, 2
      // Predicated region
      $region21: #{tpu_custom_call.1} parent=5 // pred_check
        %p169 = pneg %p168
      $region22: #{tpu_custom_call.1} parent=5 // pred_check_branch
        %171 = sbr.rel (%p169) target = $region24
      $region23: #{tpu_custom_call.1} parent=5 // pred_region
        // Predicated region
        $region25: #{tpu_custom_call.1} parent=23 // pred_check
          %p172 = pneg %p47
        $region26: #{tpu_custom_call.1} parent=23 // pred_check_branch
          %174 = sbr.rel (%p172) target = $region28
        $region27: #{tpu_custom_call.1} parent=23 // pred_region
          %s175 = smul.u32 4, %s20
          %s176 = smul.u32 2, %s21
          %p177 = scmp.lt.s32.totalorder %s175, 7
          %s178 = scalar_select %p177, %s175, 7
          %p179 = scmp.lt.s32.totalorder %s176, 1
          %s180 = scalar_select %p179, %s176, 1
          %s181 = smul.addr %s178, 2
          %s182 = sadd.s32 %s180, %s181
          %s183 = smul.addr %s182, 8
          %s184 = scalar_lea.vmem %s0, %s183
          %s185 = smul.u32 4, %s20
          %s186 = smul.u32 2, %s21
        $region28: #{tpu_custom_call.1} parent=23 // pred_fallthru
          _
        // Predicated region
        $region29: #{tpu_custom_call.1} parent=23 // pred_check
          %p187 = pneg %p94
        $region30: #{tpu_custom_call.1} parent=23 // pred_check_branch
          %189 = sbr.rel (%p187) target = $region32
        $region31: #{tpu_custom_call.1} parent=23 // pred_region
          %s190 = smul.u32 16, %s20
          %p191 = scmp.lt.s32.totalorder %s190, 31
          %s192 = scalar_select %p191, %s190, 31
          %s193 = smul.addr %s192, 8
          %s194 = scalar_lea.vmem %s2, %s193
          %s195 = smul.u32 16, %s20
        $region32: #{tpu_custom_call.1} parent=23 // pred_fallthru
          _
      $region24: #{tpu_custom_call.1} parent=5 // pred_fallthru
        _
      %p196 = scmp.le.s32.totalorder 1, %s13
      %p197 = scmp.lt.s32.totalorder %s13, 3
      %p198 = pnand %p196, %p197
      %p199 = pneg %p198
      // Predicated region
      $region33: #{tpu_custom_call.1} parent=5 // pred_check
        _
      $region34: #{tpu_custom_call.1} parent=5 // pred_check_branch
        %201 = sbr.rel (%p198) target = $region36
      $region35: #{tpu_custom_call.1} parent=5 // pred_region
        %s202 = ssub.s32 %s13, 1
        %s203 = smul.u32 4, %s22
        %s204 = smul.u32 2, %s23
        %p205 = scmp.lt.s32.totalorder %s203, 7
        %s206 = scalar_select %p205, %s203, 7
        %p207 = scmp.lt.s32.totalorder %s204, 1
        %s208 = scalar_select %p207, %s204, 1
        %s209 = smul.addr %s206, 2
        %s210 = sadd.s32 %s208, %s209
        %s211 = smul.addr %s210, 8
        %s212 = scalar_lea.vmem %s0, %s211
        %p213 = pneg %p53
        %p214 = pneg %p50
        %p215 = pneg %p74
        %p216 = pneg %p71
        %s217 = smul.u32 16, %s22
        %p218 = scmp.lt.s32.totalorder %s217, 31
        %s219 = scalar_select %p218, %s217, 31
        %s220 = smul.addr %s219, 8
        %s221 = scalar_lea.vmem %s2, %s220
        %p222 = pneg %p100
        %p223 = pneg %p97
        %p224 = pneg %p121
        %p225 = pneg %p118
        %p226 = pneg %p147
        %p227 = pneg %p144
        %s228 = sand.u32 %s134, 1
        %s229 = scalar_lea.sflag [#allocation4], %s228
        %s230 = sand.u32 %s134, 1
        %s231 = smul.addr %s230, 128
        %s232 = scalar_lea.vmem [#allocation3], %s231
        %s233 = smul.u32 4, %s22
        %s234 = smul.u32 2, %s23
        %p235 = scmp.lt.s32.totalorder %s233, 7
        %s236 = scalar_select %p235, %s233, 7
        %p237 = scmp.lt.s32.totalorder %s234, 1
        %s238 = scalar_select %p237, %s234, 1
        %s239 = smul.addr %s236, 2
        %s240 = sadd.s32 %s238, %s239
        %s241 = smul.addr %s240, 8
        %s242 = scalar_lea.vmem %s0, %s241
        %s243 = smul.u32 4, %s22
        %s244 = smul.u32 2, %s23
        %s245 = smul.u32 16, %s22
        %p246 = scmp.lt.s32.totalorder %s245, 31
        %s247 = scalar_select %p246, %s245, 31
        %s248 = smul.addr %s247, 8
        %s249 = scalar_lea.vmem %s2, %s248
        %s250 = smul.u32 16, %s22
        %s251 = smul.u32 16, %s22
        %v253 = vld [vmem:[%s242] sm:$0xff]
        %v254 = vld [vmem:[%s242 + $0x8] sm:$0xff]
        %v255 = vld [vmem:[%s242 + $0x10] sm:$0xff]
        %v256 = vld [vmem:[%s242 + $0x18] sm:$0xff]
        %v257 = vld [vmem:[%s242 + $0x20] sm:$0xff]
        %v258 = vld [vmem:[%s242 + $0x28] sm:$0xff]
        %v259 = vld [vmem:[%s242 + $0x30] sm:$0xff]
        %v260 = vld [vmem:[%s242 + $0x38] sm:$0xff]
        %v261 = vunpack.c.l.s8.bf16 %v253
        %v262 = vunpack.c.l.s8.bf16 %v254
        %v263 = vunpack.c.h.s8.bf16 %v253
        %v264 = vunpack.c.h.s8.bf16 %v254
        %v265 = vunpack.c.l.s8.bf16 %v255
        %v266 = vunpack.c.l.s8.bf16 %v256
        %v267 = vunpack.c.h.s8.bf16 %v255
        %v268 = vunpack.c.h.s8.bf16 %v256
        %v269 = vunpack.c.l.s8.bf16 %v257
        %v270 = vunpack.c.l.s8.bf16 %v258
        %v271 = vunpack.c.h.s8.bf16 %v257
        %v272 = vunpack.c.h.s8.bf16 %v258
        %v273 = vunpack.c.l.s8.bf16 %v259
        %v274 = vunpack.c.l.s8.bf16 %v260
        %v275 = vunpack.c.h.s8.bf16 %v259
        %v276 = vunpack.c.h.s8.bf16 %v260
        %s277 = smul.u32 %s23, 256
        %s278 = sshra.s32 %s277, 3
        %s279 = sand.u32 %s277, 7
        %s280 = smul.addr %s278, 4
        %s281 = scalar_lea.vmem %s1, %s280
        %v282 = vld [vmem:[%s281] sm:$0xf]
        %v283 = vld [vmem:[%s281 + $0x4] sm:$0xf]
        %v284 = vld [vmem:[%s281 + $0x8] sm:$0xf]
        %v285 = vld [vmem:[%s281 + $0xc] sm:$0xf]
        %v286 = vld [vmem:[%s281 + $0x10] sm:$0xf]
        %v287 = vld [vmem:[%s281 + $0x14] sm:$0xf]
        %v288 = vld [vmem:[%s281 + $0x18] sm:$0xf]
        %v289 = vld [vmem:[%s281 + $0x1c] sm:$0xf]
        %v290 = vld [vmem:[%s281 + $0x20] sm:$0xf]
        %v291 = vld [vmem:[%s281 + $0x24] sm:$0xf]
        %v292 = vld [vmem:[%s281 + $0x28] sm:$0xf]
        %v293 = vld [vmem:[%s281 + $0x2c] sm:$0xf]
        %v294 = vld [vmem:[%s281 + $0x30] sm:$0xf]
        %v295 = vld [vmem:[%s281 + $0x34] sm:$0xf]
        %v296 = vld [vmem:[%s281 + $0x38] sm:$0xf]
        %v297 = vld [vmem:[%s281 + $0x3c] sm:$0xf]
        %v298 = vld [vmem:[%s281 + $0x40] sm:$0xf]
        %v299 = vld [vmem:[%s281 + $0x44] sm:$0xf]
        %v300 = vld [vmem:[%s281 + $0x48] sm:$0xf]
        %v301 = vld [vmem:[%s281 + $0x4c] sm:$0xf]
        %v302 = vld [vmem:[%s281 + $0x50] sm:$0xf]
        %v303 = vld [vmem:[%s281 + $0x54] sm:$0xf]
        %v304 = vld [vmem:[%s281 + $0x58] sm:$0xf]
        %v305 = vld [vmem:[%s281 + $0x5c] sm:$0xf]
        %v306 = vld [vmem:[%s281 + $0x60] sm:$0xf]
        %v307 = vld [vmem:[%s281 + $0x64] sm:$0xf]
        %v308 = vld [vmem:[%s281 + $0x68] sm:$0xf]
        %v309 = vld [vmem:[%s281 + $0x6c] sm:$0xf]
        %v310 = vld [vmem:[%s281 + $0x70] sm:$0xf]
        %v311 = vld [vmem:[%s281 + $0x74] sm:$0xf]
        %v312 = vld [vmem:[%s281 + $0x78] sm:$0xf]
        %v313 = vld [vmem:[%s281 + $0x7c] sm:$0xf]
        %v346 = vunpack.c.l.b16 %v282
        %v347 = vunpack.c.l.b16 %v283
        %v348 = vunpack.c.l.b16 %v284
        %v349 = vunpack.c.l.b16 %v285
        %v350 = vunpack.c.l.b16 %v286
        %v351 = vunpack.c.l.b16 %v287
        %v352 = vunpack.c.l.b16 %v288
        %v353 = vunpack.c.l.b16 %v289
        %v354 = vunpack.c.l.b16 %v290
        %v355 = vunpack.c.l.b16 %v291
        %v356 = vunpack.c.l.b16 %v292
        %v357 = vunpack.c.l.b16 %v293
        %v358 = vunpack.c.l.b16 %v294
        %v359 = vunpack.c.l.b16 %v295
        %v360 = vunpack.c.l.b16 %v296
        %v361 = vunpack.c.l.b16 %v297
        %v362 = vunpack.c.l.b16 %v298
        %v363 = vunpack.c.l.b16 %v299
        %v364 = vunpack.c.l.b16 %v300
        %v365 = vunpack.c.l.b16 %v301
        %v366 = vunpack.c.l.b16 %v302
        %v367 = vunpack.c.l.b16 %v303
        %v368 = vunpack.c.l.b16 %v304
        %v369 = vunpack.c.l.b16 %v305
        %v370 = vunpack.c.l.b16 %v306
        %v371 = vunpack.c.l.b16 %v307
        %v372 = vunpack.c.l.b16 %v308
        %v373 = vunpack.c.l.b16 %v309
        %v374 = vunpack.c.l.b16 %v310
        %v375 = vunpack.c.l.b16 %v311
        %v376 = vunpack.c.l.b16 %v312
        %v377 = vunpack.c.l.b16 %v313
        %v378 = vpack.c.b16 %v347, %v346
        %v379 = vpack.c.b16 %v349, %v348
        %v380 = vpack.c.b16 %v351, %v350
        %v381 = vpack.c.b16 %v353, %v352
        %v382 = vpack.c.b16 %v355, %v354
        %v383 = vpack.c.b16 %v357, %v356
        %v384 = vpack.c.b16 %v359, %v358
        %v385 = vpack.c.b16 %v361, %v360
        %v386 = vpack.c.b16 %v363, %v362
        %v387 = vpack.c.b16 %v365, %v364
        %v388 = vpack.c.b16 %v367, %v366
        %v389 = vpack.c.b16 %v369, %v368
        %v390 = vpack.c.b16 %v371, %v370
        %v391 = vpack.c.b16 %v373, %v372
        %v392 = vpack.c.b16 %v375, %v374
        %v393 = vpack.c.b16 %v377, %v376
        %410 = vmatprep.subr.bf16.mxu0 0
        %411 = vmatpush1.bf16.msra.mxu0 %v378
        %412 = vmatprep.subr.bf16.mxu0 0
        %413 = vmatpush1.bf16.msra.mxu0 %v379
        %414 = vmatprep.subr.bf16.mxu0 0
        %415 = vmatpush1.bf16.msra.mxu0 %v380
        %416 = vmatprep.subr.bf16.mxu0 0
        %417 = vmatpush1.bf16.msra.mxu0 %v381
        %418 = vmatprep.subr.bf16.mxu0 0
        %419 = vmatpush1.bf16.msra.mxu0 %v382
        %420 = vmatprep.subr.bf16.mxu0 0
        %421 = vmatpush1.bf16.msra.mxu0 %v383
        %422 = vmatprep.subr.bf16.mxu0 0
        %423 = vmatpush1.bf16.msra.mxu0 %v384
        %424 = vmatprep.subr.bf16.mxu0 0
        %425 = vmatpush1.bf16.msra.mxu0 %v385
        %426 = vmatprep.subr.bf16.mxu0 0
        %427 = vmatpush1.bf16.msra.mxu0 %v386
        %428 = vmatprep.subr.bf16.mxu0 0
        %429 = vmatpush1.bf16.msra.mxu0 %v387
        %430 = vmatprep.subr.bf16.mxu0 0
        %431 = vmatpush1.bf16.msra.mxu0 %v388
        %432 = vmatprep.subr.bf16.mxu0 0
        %433 = vmatpush1.bf16.msra.mxu0 %v389
        %434 = vmatprep.subr.bf16.mxu0 0
        %435 = vmatpush1.bf16.msra.mxu0 %v390
        %436 = vmatprep.subr.bf16.mxu0 0
        %437 = vmatpush1.bf16.msra.mxu0 %v391
        %438 = vmatprep.subr.bf16.mxu0 0
        %439 = vmatpush1.bf16.msra.mxu0 %v392
        %440 = vmatprep.subr.bf16.mxu0 0
        %441 = vmatpush1.bf16.msra.mxu0 %v393
        %442 = vmatprep.mubr.bf16.mxu0 %v262
        %443 = vmatmul.mubr.bf16.gmra.mrb[0].mxu0 %v261
        %v444 = vpop.f32.mrb[0].mxu0
        %v445 = vadd.f32 0.0, %v444
        %v446 = vpop.f32.mrb[0].mxu0
        %v447 = vpop.f32.mrb[0].mxu0
        %v448 = vadd.f32 0.0, %v447
        %v449 = vpop.f32.mrb[0].mxu0
        %450 = vmatprep.mubr.bf16.mxu0 %v264
        %451 = vmatmul.mubr.bf16.gmra.mrb[0].mxu0 %v263
        %v452 = vpop.f32.mrb[0].mxu0
        %v453 = vadd.f32 0.0, %v452
        %v454 = vpop.f32.mrb[0].mxu0
        %v455 = vpop.f32.mrb[0].mxu0
        %v456 = vadd.f32 0.0, %v455
        %v457 = vpop.f32.mrb[0].mxu0
        %458 = vmatprep.mubr.bf16.mxu0 %v266
        %459 = vmatmul.mubr.bf16.gmra.mrb[0].mxu0 %v265
        %v460 = vpop.f32.mrb[0].mxu0
        %v461 = vadd.f32 0.0, %v460
        %v462 = vpop.f32.mrb[0].mxu0
        %v463 = vpop.f32.mrb[0].mxu0
        %v464 = vadd.f32 0.0, %v463
        %v465 = vpop.f32.mrb[0].mxu0
        %466 = vmatprep.mubr.bf16.mxu0 %v268
        %467 = vmatmul.mubr.bf16.gmra.mrb[0].mxu0 %v267
        %v468 = vpop.f32.mrb[0].mxu0
        %v469 = vadd.f32 0.0, %v468
        %v470 = vpop.f32.mrb[0].mxu0
        %v471 = vpop.f32.mrb[0].mxu0
        %v472 = vadd.f32 0.0, %v471
        %v473 = vpop.f32.mrb[0].mxu0
        %474 = vmatprep.mubr.bf16.mxu0 %v270
        %475 = vmatmul.mubr.bf16.gmra.mrb[0].mxu0 %v269
        %v476 = vpop.f32.mrb[0].mxu0
        %v477 = vadd.f32 0.0, %v476
        %v478 = vpop.f32.mrb[0].mxu0
        %v479 = vpop.f32.mrb[0].mxu0
        %v480 = vadd.f32 0.0, %v479
        %v481 = vpop.f32.mrb[0].mxu0
        %482 = vmatprep.mubr.bf16.mxu0 %v272
        %483 = vmatmul.mubr.bf16.gmra.mrb[0].mxu0 %v271
        %v484 = vpop.f32.mrb[0].mxu0
        %v485 = vadd.f32 0.0, %v484
        %v486 = vpop.f32.mrb[0].mxu0
        %v487 = vpop.f32.mrb[0].mxu0
        %v488 = vadd.f32 0.0, %v487
        %v489 = vpop.f32.mrb[0].mxu0
        %490 = vmatprep.mubr.bf16.mxu0 %v274
        %491 = vmatmul.mubr.bf16.gmra.mrb[0].mxu0 %v273
        %v492 = vpop.f32.mrb[0].mxu0
        %v493 = vadd.f32 0.0, %v492
        %v494 = vpop.f32.mrb[0].mxu0
        %v495 = vpop.f32.mrb[0].mxu0
        %v496 = vadd.f32 0.0, %v495
        %v497 = vpop.f32.mrb[0].mxu0
        %498 = vmatprep.mubr.bf16.mxu0 %v276
        %499 = vmatmul.mubr.bf16.gmra.mrb[0].mxu0 %v275
        %v500 = vpop.f32.mrb[0].mxu0
        %v501 = vadd.f32 0.0, %v500
        %v502 = vpop.f32.mrb[0].mxu0
        %v503 = vpop.f32.mrb[0].mxu0
        %v504 = vadd.f32 0.0, %v503
        %v505 = vpop.f32.mrb[0].mxu0
        %506 = vdwg.mxu0
        %p507 = scmp.eq.s32.totalorder %s23, 0
        // Predicated region
        $region37: #{tpu_custom_call.1} parent=35 // pred_check
          %p508 = pneg %p507
        $region38: #{tpu_custom_call.1} parent=35 // pred_check_branch
          %510 = sbr.rel (%p508) target = $region40
        $region39: #{tpu_custom_call.1} parent=35 // pred_region
          %511 = vst [vmem:[#allocation2] sm:$0xff] %v445
          %512 = vst [vmem:[#allocation2 + $0x8] sm:$0xff] %v448
          %513 = vst [vmem:[#allocation2 + $0x10] sm:$0xff] %v453
          %514 = vst [vmem:[#allocation2 + $0x18] sm:$0xff] %v456
          %515 = vst [vmem:[#allocation2 + $0x20] sm:$0xff] %v461
          %516 = vst [vmem:[#allocation2 + $0x28] sm:$0xff] %v464
          %517 = vst [vmem:[#allocation2 + $0x30] sm:$0xff] %v469
          %518 = vst [vmem:[#allocation2 + $0x38] sm:$0xff] %v472
          %519 = vst [vmem:[#allocation2 + $0x40] sm:$0xff] %v477
          %520 = vst [vmem:[#allocation2 + $0x48] sm:$0xff] %v480
          %521 = vst [vmem:[#allocation2 + $0x50] sm:$0xff] %v485
          %522 = vst [vmem:[#allocation2 + $0x58] sm:$0xff] %v488
          %523 = vst [vmem:[#allocation2 + $0x60] sm:$0xff] %v493
          %524 = vst [vmem:[#allocation2 + $0x68] sm:$0xff] %v496
          %525 = vst [vmem:[#allocation2 + $0x70] sm:$0xff] %v501
          %526 = vst [vmem:[#allocation2 + $0x78] sm:$0xff] %v504
        $region40: #{tpu_custom_call.1} parent=35 // pred_fallthru
          _
        %p527 = scmp.ne.s32.totalorder %s23, 0
        // Predicated region
        $region41: #{tpu_custom_call.1} parent=35 // pred_check
          %p528 = pneg %p527
        $region42: #{tpu_custom_call.1} parent=35 // pred_check_branch
          %530 = sbr.rel (%p528) target = $region44
        $region43: #{tpu_custom_call.1} parent=35 // pred_region
          %v531 = vld [vmem:[#allocation2] sm:$0xff]
          %v532 = vld [vmem:[#allocation2 + $0x8] sm:$0xff]
          %v533 = vld [vmem:[#allocation2 + $0x10] sm:$0xff]
          %v534 = vld [vmem:[#allocation2 + $0x18] sm:$0xff]
          %v535 = vld [vmem:[#allocation2 + $0x20] sm:$0xff]
          %v536 = vld [vmem:[#allocation2 + $0x28] sm:$0xff]
          %v537 = vld [vmem:[#allocation2 + $0x30] sm:$0xff]
          %v538 = vld [vmem:[#allocation2 + $0x38] sm:$0xff]
          %v539 = vld [vmem:[#allocation2 + $0x40] sm:$0xff]
          %v540 = vld [vmem:[#allocation2 + $0x48] sm:$0xff]
          %v541 = vld [vmem:[#allocation2 + $0x50] sm:$0xff]
          %v542 = vld [vmem:[#allocation2 + $0x58] sm:$0xff]
          %v543 = vld [vmem:[#allocation2 + $0x60] sm:$0xff]
          %v544 = vld [vmem:[#allocation2 + $0x68] sm:$0xff]
          %v545 = vld [vmem:[#allocation2 + $0x70] sm:$0xff]
          %v546 = vld [vmem:[#allocation2 + $0x78] sm:$0xff]
          %v547 = vadd.f32 %v531, %v445
          %v548 = vadd.f32 %v532, %v448
          %v549 = vadd.f32 %v533, %v453
          %v550 = vadd.f32 %v534, %v456
          %v551 = vadd.f32 %v535, %v461
          %v552 = vadd.f32 %v536, %v464
          %v553 = vadd.f32 %v537, %v469
          %v554 = vadd.f32 %v538, %v472
          %v555 = vadd.f32 %v539, %v477
          %v556 = vadd.f32 %v540, %v480
          %v557 = vadd.f32 %v541, %v485
          %v558 = vadd.f32 %v542, %v488
          %v559 = vadd.f32 %v543, %v493
          %v560 = vadd.f32 %v544, %v496
          %v561 = vadd.f32 %v545, %v501
          %v562 = vadd.f32 %v546, %v504
          %563 = vst [vmem:[#allocation2] sm:$0xff] %v547
          %564 = vst [vmem:[#allocation2 + $0x8] sm:$0xff] %v548
          %565 = vst [vmem:[#allocation2 + $0x10] sm:$0xff] %v549
          %566 = vst [vmem:[#allocation2 + $0x18] sm:$0xff] %v550
          %567 = vst [vmem:[#allocation2 + $0x20] sm:$0xff] %v551
          %568 = vst [vmem:[#allocation2 + $0x28] sm:$0xff] %v552
          %569 = vst [vmem:[#allocation2 + $0x30] sm:$0xff] %v553
          %570 = vst [vmem:[#allocation2 + $0x38] sm:$0xff] %v554
          %571 = vst [vmem:[#allocation2 + $0x40] sm:$0xff] %v555
          %572 = vst [vmem:[#allocation2 + $0x48] sm:$0xff] %v556
          %573 = vst [vmem:[#allocation2 + $0x50] sm:$0xff] %v557
          %574 = vst [vmem:[#allocation2 + $0x58] sm:$0xff] %v558
          %575 = vst [vmem:[#allocation2 + $0x60] sm:$0xff] %v559
          %576 = vst [vmem:[#allocation2 + $0x68] sm:$0xff] %v560
          %577 = vst [vmem:[#allocation2 + $0x70] sm:$0xff] %v561
          %578 = vst [vmem:[#allocation2 + $0x78] sm:$0xff] %v562
        $region44: #{tpu_custom_call.1} parent=35 // pred_fallthru
          _
        // Predicated region
        $region45: #{tpu_custom_call.1} parent=35 // pred_check
          %p579 = pneg %p507
        $region46: #{tpu_custom_call.1} parent=35 // pred_check_branch
          %581 = sbr.rel (%p579) target = $region48
        $region47: #{tpu_custom_call.1} parent=35 // pred_region
          %v582 = vld [vmem:[%s249] sm:$0xff]
          %v583 = vld [vmem:[%s249 + $0x8] sm:$0xff]
          %v584 = vld [vmem:[%s249 + $0x10] sm:$0xff]
          %v585 = vld [vmem:[%s249 + $0x18] sm:$0xff]
          %v586 = vld [vmem:[%s249 + $0x20] sm:$0xff]
          %v587 = vld [vmem:[%s249 + $0x28] sm:$0xff]
          %v588 = vld [vmem:[%s249 + $0x30] sm:$0xff]
          %v589 = vld [vmem:[%s249 + $0x38] sm:$0xff]
          %v590 = vld [vmem:[%s249 + $0x40] sm:$0xff]
          %v591 = vld [vmem:[%s249 + $0x48] sm:$0xff]
          %v592 = vld [vmem:[%s249 + $0x50] sm:$0xff]
          %v593 = vld [vmem:[%s249 + $0x58] sm:$0xff]
          %v594 = vld [vmem:[%s249 + $0x60] sm:$0xff]
          %v595 = vld [vmem:[%s249 + $0x68] sm:$0xff]
          %v596 = vld [vmem:[%s249 + $0x70] sm:$0xff]
          %v597 = vld [vmem:[%s249 + $0x78] sm:$0xff]
          %v598 = vld [vmem:[#allocation2] sm:$0xff]
          %v599 = vld [vmem:[#allocation2 + $0x8] sm:$0xff]
          %v600 = vld [vmem:[#allocation2 + $0x10] sm:$0xff]
          %v601 = vld [vmem:[#allocation2 + $0x18] sm:$0xff]
          %v602 = vld [vmem:[#allocation2 + $0x20] sm:$0xff]
          %v603 = vld [vmem:[#allocation2 + $0x28] sm:$0xff]
          %v604 = vld [vmem:[#allocation2 + $0x30] sm:$0xff]
          %v605 = vld [vmem:[#allocation2 + $0x38] sm:$0xff]
          %v606 = vld [vmem:[#allocation2 + $0x40] sm:$0xff]
          %v607 = vld [vmem:[#allocation2 + $0x48] sm:$0xff]
          %v608 = vld [vmem:[#allocation2 + $0x50] sm:$0xff]
          %v609 = vld [vmem:[#allocation2 + $0x58] sm:$0xff]
          %v610 = vld [vmem:[#allocation2 + $0x60] sm:$0xff]
          %v611 = vld [vmem:[#allocation2 + $0x68] sm:$0xff]
          %v612 = vld [vmem:[#allocation2 + $0x70] sm:$0xff]
          %v613 = vld [vmem:[#allocation2 + $0x78] sm:$0xff]
          %615 = vset.pattern.permute.xlu0 0
          %616 = vperm.xlu0 %615, %v582
          %v617 = vpop.permute.xlu0 %616
          %620 = vset.pattern.permute.xlu0 0
          %621 = vperm.xlu0 %620, %v583
          %v622 = vpop.permute.xlu0 %621
          %625 = vset.pattern.permute.xlu0 0
          %626 = vperm.xlu0 %625, %v584
          %v627 = vpop.permute.xlu0 %626
          %630 = vset.pattern.permute.xlu0 0
          %631 = vperm.xlu0 %630, %v585
          %v632 = vpop.permute.xlu0 %631
          %635 = vset.pattern.permute.xlu0 0
          %636 = vperm.xlu0 %635, %v586
          %v637 = vpop.permute.xlu0 %636
          %640 = vset.pattern.permute.xlu0 0
          %641 = vperm.xlu0 %640, %v587
          %v642 = vpop.permute.xlu0 %641
          %645 = vset.pattern.permute.xlu0 0
          %646 = vperm.xlu0 %645, %v588
          %v647 = vpop.permute.xlu0 %646
          %650 = vset.pattern.permute.xlu0 0
          %651 = vperm.xlu0 %650, %v589
          %v652 = vpop.permute.xlu0 %651
          %655 = vset.pattern.permute.xlu0 0
          %656 = vperm.xlu0 %655, %v590
          %v657 = vpop.permute.xlu0 %656
          %660 = vset.pattern.permute.xlu0 0
          %661 = vperm.xlu0 %660, %v591
          %v662 = vpop.permute.xlu0 %661
          %665 = vset.pattern.permute.xlu0 0
          %666 = vperm.xlu0 %665, %v592
          %v667 = vpop.permute.xlu0 %666
          %670 = vset.pattern.permute.xlu0 0
          %671 = vperm.xlu0 %670, %v593
          %v672 = vpop.permute.xlu0 %671
          %675 = vset.pattern.permute.xlu0 0
          %676 = vperm.xlu0 %675, %v594
          %v677 = vpop.permute.xlu0 %676
          %680 = vset.pattern.permute.xlu0 0
          %681 = vperm.xlu0 %680, %v595
          %v682 = vpop.permute.xlu0 %681
          %685 = vset.pattern.permute.xlu0 0
          %686 = vperm.xlu0 %685, %v596
          %v687 = vpop.permute.xlu0 %686
          %690 = vset.pattern.permute.xlu0 0
          %691 = vperm.xlu0 %690, %v597
          %v692 = vpop.permute.xlu0 %691
          %v694 = vmul.f32 %v617, %v598
          %v695 = vmul.f32 %v622, %v599
          %v696 = vmul.f32 %v627, %v600
          %v697 = vmul.f32 %v632, %v601
          %v698 = vmul.f32 %v637, %v602
          %v699 = vmul.f32 %v642, %v603
          %v700 = vmul.f32 %v647, %v604
          %v701 = vmul.f32 %v652, %v605
          %v702 = vmul.f32 %v657, %v606
          %v703 = vmul.f32 %v662, %v607
          %v704 = vmul.f32 %v667, %v608
          %v705 = vmul.f32 %v672, %v609
          %v706 = vmul.f32 %v677, %v610
          %v707 = vmul.f32 %v682, %v611
          %v708 = vmul.f32 %v687, %v612
          %v709 = vmul.f32 %v692, %v613
          %v710 = vld [vmem:[%s3] sm:$0x1]
          %v712 = vlaneseq
          %v713 = vshrl.u32 %v712, 7
          %v714 = vsub.s32 0, %v713
          %v715 = vrot.slane %v710, %v714
          %v717 = vadd.f32 %v694, %v715
          %v718 = vadd.f32 %v695, %v715
          %v719 = vadd.f32 %v696, %v715
          %v720 = vadd.f32 %v697, %v715
          %v721 = vadd.f32 %v698, %v715
          %v722 = vadd.f32 %v699, %v715
          %v723 = vadd.f32 %v700, %v715
          %v724 = vadd.f32 %v701, %v715
          %v725 = vadd.f32 %v702, %v715
          %v726 = vadd.f32 %v703, %v715
          %v727 = vadd.f32 %v704, %v715
          %v728 = vadd.f32 %v705, %v715
          %v729 = vadd.f32 %v706, %v715
          %v730 = vadd.f32 %v707, %v715
          %v731 = vadd.f32 %v708, %v715
          %v732 = vadd.f32 %v709, %v715
          %733 = vst [vmem:[%s232] sm:$0xff] %v717
          %734 = vst [vmem:[%s232 + $0x8] sm:$0xff] %v718
          %735 = vst [vmem:[%s232 + $0x10] sm:$0xff] %v719
          %736 = vst [vmem:[%s232 + $0x18] sm:$0xff] %v720
          %737 = vst [vmem:[%s232 + $0x20] sm:$0xff] %v721
          %738 = vst [vmem:[%s232 + $0x28] sm:$0xff] %v722
          %739 = vst [vmem:[%s232 + $0x30] sm:$0xff] %v723
          %740 = vst [vmem:[%s232 + $0x38] sm:$0xff] %v724
          %741 = vst [vmem:[%s232 + $0x40] sm:$0xff] %v725
          %742 = vst [vmem:[%s232 + $0x48] sm:$0xff] %v726
          %743 = vst [vmem:[%s232 + $0x50] sm:$0xff] %v727
          %744 = vst [vmem:[%s232 + $0x58] sm:$0xff] %v728
          %745 = vst [vmem:[%s232 + $0x60] sm:$0xff] %v729
          %746 = vst [vmem:[%s232 + $0x68] sm:$0xff] %v730
          %747 = vst [vmem:[%s232 + $0x70] sm:$0xff] %v731
          %748 = vst [vmem:[%s232 + $0x78] sm:$0xff] %v732
        $region48: #{tpu_custom_call.1} parent=35 // pred_fallthru
          _
        %s749 = sand.u32 %s134, 1
        %s750 = scalar_lea.sflag [#allocation4], %s749
        %s751 = sand.u32 %s134, 1
        %s752 = smul.addr %s751, 128
        %s753 = scalar_lea.vmem [#allocation3], %s752
        // Predicated region
        $region49: #{tpu_custom_call.1} parent=35 // pred_check
          %p754 = pneg %p144
        $region50: #{tpu_custom_call.1} parent=35 // pred_check_branch
          %756 = sbr.rel (%p754) target = $region52
        $region51: #{tpu_custom_call.1} parent=35 // pred_region
          %s757 = smul.u32 16, %s22
          %s759 = ssub.s32 2048, 2048
          %760 = vsyncadd %s750, %s759
          %s761 = smul.addr %s757, 128
          %s762 = scalar_lea.hbm %s4, %s761
          %s763 = sshll.u32 %s753, 4
          %s764 = int_to_ptr.vmem [resolvable:$true] %s763
          %769 = dma.vmem_to_hbm [thread:$0]  %s764, 2048, %s762, %s750, 128, 128, 8
        $region52: #{tpu_custom_call.1} parent=35 // pred_fallthru
          _
      $region36: #{tpu_custom_call.1} parent=5 // pred_fallthru
        _
      %p770 = scmp.le.s32.totalorder 2, %s13
      // Predicated region
      $region53: #{tpu_custom_call.1} parent=5 // pred_check
        %p771 = pneg %p770
      $region54: #{tpu_custom_call.1} parent=5 // pred_check_branch
        %773 = sbr.rel (%p771) target = $region56
      $region55: #{tpu_custom_call.1} parent=5 // pred_region
        %s774 = ssub.s32 %s13, 2
        // Predicated region
        $region57: #{tpu_custom_call.1} parent=55 // pred_check
          %p775 = pneg %p150
        $region58: #{tpu_custom_call.1} parent=55 // pred_check_branch
          %777 = sbr.rel (%p775) target = $region60
        $region59: #{tpu_custom_call.1} parent=55 // pred_region
          %s778 = sand.u32 %s135, 1
          %s779 = scalar_lea.sflag [#allocation4], %s778
          %s780 = sand.u32 %s135, 1
          %s781 = smul.addr %s780, 128
          %s782 = scalar_lea.vmem [#allocation3], %s781
          %783 = dma.done %s779, 2048
        $region60: #{tpu_custom_call.1} parent=55 // pred_fallthru
          _
      $region56: #{tpu_custom_call.1} parent=5 // pred_fallthru
        _
    $region6: #{tpu_custom_call.1} parent=1 // loop_footer
      %s17 = sadd.s32 1, %s13
    $region7: #{tpu_custom_call.1} parent=1 // loop_footer_branch
      %12 = sbr.rel target = $region3
    $region8: #{tpu_custom_call.1} parent=1 // loop_exit
      _
    %784 = vsyncpa [#allocation4], 1
    %s785 = scalar_lea.sflag [#allocation4], 1
    %786 = vsyncpa %s785, 1

</llo_original>
